<compile_context>
chip_gen: v6e
topology: v6e:2x2x1
jax: 0.10.0
libtpu: 0.0.40
codegen_flags: <defaults>
</compile_context>

<pallas_src>
import numpy as np
import jax
import jax.numpy as jnp
from jax.experimental import pallas as pl
from jax.experimental.pallas import tpu as pltpu


def _make_kernel(K, dilation, L, C_in, C_out, C_in_pad, C_out_pad, batch_tile,
                 has_downsample, mxu_dtype):
    shifts = tuple((K - 1 - k) * dilation for k in range(K))

    def _build_rhs(chunks, c_rows):
        # chunks: batch_tile tiles of shape (c_rows, L), channel-padded.
        # Returns (K*c_rows, batch_tile*L): rows k*c_rows + c hold channel c
        # delayed by shifts[k] samples (zeros flow in on the left = causal pad,
        # which also realizes the chomp).
        dt = chunks[0].dtype
        zblk = {s: jnp.zeros((c_rows, s), dt) for s in set(shifts) if s > 0}
        cols = []
        for xb in chunks:
            taps = [xb if s == 0 else
                    jnp.concatenate([zblk[s], xb[:, :L - s]], axis=1)
                    for s in shifts]
            cols.append(jnp.concatenate(taps, axis=0))       # (K*c_rows, L)
        return cols[0] if len(cols) == 1 else jnp.concatenate(cols, axis=1)

    def kernel(*refs):
        if has_downsample:
            x_ref, w1_ref, b1_ref, w2_ref, b2_ref, wds_ref, bds_ref, o_ref = refs
        else:
            x_ref, w1_ref, b1_ref, w2_ref, b2_ref, o_ref = refs

        BTL = batch_tile * L

        # Load per-batch (C_in, L) tiles; pad channels to a multiple of 8 so the
        # contraction-dim concat below stays sublane-aligned.
        if C_in_pad > C_in:
            zc = jnp.zeros((C_in_pad - C_in, L), mxu_dtype)
        x_chunks = []
        for b in range(batch_tile):                 # batch_tile is capped (<=8)
            xb = x_ref[b].astype(mxu_dtype)
            if C_in_pad > C_in:
                xb = jnp.concatenate([xb, zc], axis=0)
            x_chunks.append(xb)

        # conv1 (+bias) -> chomp (implicit in the causal shifts) -> ReLU.
        rhs1 = _build_rhs(x_chunks, C_in_pad)                 # (K*C_in_pad, bt*L)
        out1 = jnp.dot(w1_ref[...], rhs1, preferred_element_type=jnp.float32)
        out1 = jnp.maximum(out1 + b1_ref[...], 0.0)           # (C_out, bt*L) f32

        # conv2 (+bias) -> chomp -> ReLU, same weight-stationary wide dot.
        o1 = out1.astype(mxu_dtype)
        if C_out_pad > C_out:
            o1 = jnp.concatenate(
                [o1, jnp.zeros((C_out_pad - C_out, BTL), mxu_dtype)], axis=0)
        o1_chunks = [o1[:, b * L:(b + 1) * L] for b in range(batch_tile)]
        rhs2 = _build_rhs(o1_chunks, C_out_pad)               # (K*C_out_pad, bt*L)
        out2 = jnp.dot(w2_ref[...], rhs2, preferred_element_type=jnp.float32)
        out2 = jnp.maximum(out2 + b2_ref[...], 0.0)

        # Residual path (1x1 conv when channel counts differ).
        if has_downsample:
            x_wide = (x_chunks[0] if batch_tile == 1
                      else jnp.concatenate(x_chunks, axis=1))  # (C_in_pad, bt*L)
            res = jnp.dot(wds_ref[...], x_wide, preferred_element_type=jnp.float32)
            res = res + bds_ref[...]
        else:
            xs = [x_ref[b].astype(jnp.float32) for b in range(batch_tile)]
            res = xs[0] if batch_tile == 1 else jnp.concatenate(xs, axis=1)

        y = jnp.maximum(out2 + res, 0.0).astype(o_ref.dtype)
        for b in range(batch_tile):                 # 128-lane (unmasked) stores
            o_ref[b] = y[:, b * L:(b + 1) * L]

    return kernel


def temporal_block_forward(x, params, *, kernel_size, stride, dilation, padding,
                           batch_tile=None, use_bf16_matmul=False):
    """x: (N, C_in, L).  Weights in `params` are the *effective* (post
    weight-norm) Conv1d weights in PyTorch layout (C_out, C_in, K)."""
    assert stride == 1, "TCN blocks use stride=1"
    # chomp(conv(x)) has length L + padding - dilation*(K-1); the residual add
    # in PyTorch only type-checks when this equals L:
    assert padding == dilation * (kernel_size - 1)

    N, C_in, L = x.shape
    assert padding < L
    w1, b1 = params["w1"], params["b1"]
    w2, b2 = params["w2"], params["b2"]
    C_out = w1.shape[0]
    has_downsample = C_in != C_out
    C_in_pad = ((C_in + 7) // 8) * 8
    C_out_pad = ((C_out + 7) // 8) * 8
    K = kernel_size

    if batch_tile is None:
        # Cap the tile so (a) the double-buffered in/out blocks plus the f32
        # wide working set stay far below the smallest scoped-VMEM default
        # (16 MiB on v5e; v7x has only 64 MiB physical), and (b) there are
        # >= 8 grid steps when the batch allows it, so the BlockSpec pipeline
        # can hide the HBM DMA and both v7x TensorCores get several steps.
        budget = 8 * 1024 * 1024
        per_b = (2 * (C_in + C_out) * L * 4
                 + (K * (C_in_pad + C_out_pad) + 4 * C_out) * L * 4)
        cap = max(1, min(8, budget // max(per_b, 1)))
        divisors = [d for d in range(1, N + 1) if N % d == 0 and d <= cap]
        pipelined = [d for d in divisors if N // d >= 8]
        if pipelined:
            batch_tile = max(pipelined)
        else:
            two_step = [d for d in divisors if N // d >= 2]
            batch_tile = max(two_step) if two_step else max(divisors)
    assert N % batch_tile == 0
    grid = (N // batch_tile,)

    mxu_dtype = jnp.bfloat16 if use_bf16_matmul else jnp.float32

    def fuse(w, c_pad):
        # (C_out, C, K) -> (C_out, K*c_pad); column k*c_pad + c = w[:, c, k].
        # Zero-padded channel columns keep every tap chunk sublane-aligned.
        co, c, kk = w.shape
        wt = jnp.zeros((co, kk, c_pad), jnp.float32)
        wt = wt.at[:, :, :c].set(jnp.transpose(w, (0, 2, 1)))
        return wt.reshape(co, kk * c_pad)

    w1f = fuse(w1, C_in_pad).astype(mxu_dtype)       # (C_out, K*C_in_pad)
    w2f = fuse(w2, C_out_pad).astype(mxu_dtype)      # (C_out, K*C_out_pad)
    b1c = jnp.asarray(b1, jnp.float32)[:, None]      # biases stay f32 (VPU add)
    b2c = jnp.asarray(b2, jnp.float32)[:, None]

    in_specs = [
        pl.BlockSpec((batch_tile, C_in, L), lambda n: (n, 0, 0)),
        pl.BlockSpec(w1f.shape, lambda n: (0, 0)),
        pl.BlockSpec(b1c.shape, lambda n: (0, 0)),
        pl.BlockSpec(w2f.shape, lambda n: (0, 0)),
        pl.BlockSpec(b2c.shape, lambda n: (0, 0)),
    ]
    args = [x, w1f, b1c, w2f, b2c]
    flops = 2 * N * L * C_out * K * (C_in_pad + C_out_pad)
    if has_downsample:
        wds = jnp.zeros((C_out, C_in_pad), jnp.float32)
        wds = wds.at[:, :C_in].set(params["wds"][:, :, 0]).astype(mxu_dtype)
        bds = jnp.asarray(params["bds"], jnp.float32)[:, None]
        in_specs += [pl.BlockSpec(wds.shape, lambda n: (0, 0)),
                     pl.BlockSpec(bds.shape, lambda n: (0, 0))]
        args += [wds, bds]
        flops += 2 * N * L * C_out * C_in_pad

    kernel = _make_kernel(K, dilation, L, C_in, C_out, C_in_pad, C_out_pad,
                          batch_tile, has_downsample, mxu_dtype)

    itemsize = jnp.dtype(x.dtype).itemsize
    bytes_accessed = (N * C_in * L + N * C_out * L) * itemsize + sum(
        int(a.size) * jnp.dtype(a.dtype).itemsize for a in args[1:])

    return pl.pallas_call(
        kernel,
        out_shape=jax.ShapeDtypeStruct((N, C_out, L), x.dtype),
        grid_spec=pltpu.PrefetchScalarGridSpec(
            num_scalar_prefetch=0,
            grid=grid,
            in_specs=in_specs,
            out_specs=pl.BlockSpec((batch_tile, C_out, L), lambda n: (n, 0, 0)),
        ),
        compiler_params=pltpu.CompilerParams(dimension_semantics=("parallel",)),
        cost_estimate=pl.CostEstimate(flops=flops, transcendentals=0,
                                      bytes_accessed=bytes_accessed),
    )(*args)


def make_params(key, C_in, C_out, K):
    """Deterministic synthetic parameters.  conv1/conv2 use weight_norm:
    effective_w = g * v / ||v||  (norm over (in_channels, kernel) per out ch)."""
    ks = jax.random.split(key, 8)

    def wn(v, g):
        nrm = jnp.sqrt(jnp.sum(v ** 2, axis=(1, 2), keepdims=True))
        return g[:, None, None] * v / nrm

    v1 = 0.01 * jax.random.normal(ks[0], (C_out, C_in, K), jnp.float32)
    g1 = 1.0 + 0.1 * jax.random.normal(ks[1], (C_out,), jnp.float32)
    b1 = 0.05 * jax.random.normal(ks[2], (C_out,), jnp.float32)
    v2 = 0.01 * jax.random.normal(ks[3], (C_out, C_out, K), jnp.float32)
    g2 = 1.0 + 0.1 * jax.random.normal(ks[4], (C_out,), jnp.float32)
    b2 = 0.05 * jax.random.normal(ks[5], (C_out,), jnp.float32)
    params = dict(w1=wn(v1, g1), b1=b1, w2=wn(v2, g2), b2=b2)
    if C_in != C_out:
        params["wds"] = 0.01 * jax.random.normal(ks[6], (C_out, C_in, 1), jnp.float32)
        params["bds"] = 0.05 * jax.random.normal(ks[7], (C_out,), jnp.float32)
    return params


def temporal_block_ref(x, params, *, dilation, padding):
    """Pure-JAX reference mirroring the PyTorch forward (inference mode)."""
    dn = ("NCH", "OIH", "NCH")

    def conv(y, w, b):
        y = jax.lax.conv_general_dilated(y, w, (1,), [(padding, padding)],
                                         rhs_dilation=(dilation,),
                                         dimension_numbers=dn)
        return y + b[None, :, None]

    out = conv(x, params["w1"], params["b1"])[:, :, :-padding]
    out = jnp.maximum(out, 0.0)
    out = conv(out, params["w2"], params["b2"])[:, :, :-padding]
    out = jnp.maximum(out, 0.0)
    if "wds" in params:
        res = jax.lax.conv_general_dilated(x, params["wds"], (1,), [(0, 0)],
                                           dimension_numbers=dn)
        res = res + params["bds"][None, :, None]
    else:
        res = x
    return jnp.maximum(out + res, 0.0)


if __name__ == "__main__":
    # Small shapes consistent with TemporalBlock: n_inputs=4, n_outputs=8,
    # kernel_size=3, stride=1, dilation=2, padding=(k-1)*dilation=4.
    N, C_in, C_out, L = 2, 4, 8, 128
    K, stride, dilation = 3, 1, 2
    padding = (K - 1) * dilation

    key = jax.random.PRNGKey(0)
    kx, kp = jax.random.split(key)
    x = jax.random.normal(kx, (N, C_in, L), jnp.float32)
    params = make_params(kp, C_in, C_out, K)

    out = temporal_block_forward(x, params, kernel_size=K, stride=stride,
                                 dilation=dilation, padding=padding)
    out = jax.block_until_ready(out)

    ref = temporal_block_ref(x, params, dilation=dilation, padding=padding)
    np.testing.assert_allclose(np.asarray(out), np.asarray(ref),
                               rtol=1e-4, atol=1e-5)
    print("KERNEL_OK")
</pallas_src>

<mosaic_0001>
module attributes {stable_mosaic.version = 11 : i64} {
  func.func @kernel(%arg0: i32, %arg1: memref<1x4x128xf32, #tpu.memory_space<vmem>>, %arg2: memref<8x24xf32, #tpu.memory_space<vmem>>, %arg3: memref<8x1xf32, #tpu.memory_space<vmem>>, %arg4: memref<8x24xf32, #tpu.memory_space<vmem>>, %arg5: memref<8x1xf32, #tpu.memory_space<vmem>>, %arg6: memref<8x8xf32, #tpu.memory_space<vmem>>, %arg7: memref<8x1xf32, #tpu.memory_space<vmem>>, %arg8: memref<1x8x128xf32, #tpu.memory_space<vmem>>) attributes {dimension_semantics = [#tpu.dimension_semantics<parallel>], iteration_bounds = array<i64: 2>, scalar_prefetch = 0 : i64, scratch_operands = 0 : i64, tpu.core_type = #tpu.core_type<tc>, window_params = [{transform_indices = @transform_0, window_bounds = array<i64: 1, 4, 128>}, {pipeline_mode = #tpu.pipeline_mode<synchronous>, transform_indices = @transform_1, window_bounds = array<i64: 8, 24>}, {pipeline_mode = #tpu.pipeline_mode<synchronous>, transform_indices = @transform_2, window_bounds = array<i64: 8, 1>}, {pipeline_mode = #tpu.pipeline_mode<synchronous>, transform_indices = @transform_3, window_bounds = array<i64: 8, 24>}, {pipeline_mode = #tpu.pipeline_mode<synchronous>, transform_indices = @transform_4, window_bounds = array<i64: 8, 1>}, {pipeline_mode = #tpu.pipeline_mode<synchronous>, transform_indices = @transform_5, window_bounds = array<i64: 8, 8>}, {pipeline_mode = #tpu.pipeline_mode<synchronous>, transform_indices = @transform_6, window_bounds = array<i64: 8, 1>}, {transform_indices = @transform_7, window_bounds = array<i64: 1, 8, 128>}]} {
    %cst = arith.constant 0.000000e+00 : f32
    %0 = vector.broadcast %cst : f32 to vector<4x128xf32>
    %c0 = arith.constant 0 : index
    %c0_0 = arith.constant 0 : index
    %c0_1 = arith.constant 0 : index
    %1 = vector.load %arg1[%c0, %c0_0, %c0_1] : memref<1x4x128xf32, #tpu.memory_space<vmem>>, vector<1x4x128xf32>
    %2 = vector.shape_cast %1 : vector<1x4x128xf32> to vector<4x128xf32>
    %3 = tpu.concatenate %2, %0 in 0 : vector<4x128xf32>, vector<4x128xf32> -> vector<8x128xf32>
    %cst_2 = arith.constant 0.000000e+00 : f32
    %4 = vector.broadcast %cst_2 : f32 to vector<8x2xf32>
    %cst_3 = arith.constant 0.000000e+00 : f32
    %5 = vector.broadcast %cst_3 : f32 to vector<8x4xf32>
    %6 = vector.extract_strided_slice %3 {offsets = [0, 0], sizes = [8, 124], strides = [1, 1]} : vector<8x128xf32> to vector<8x124xf32>
    %7 = tpu.concatenate %5, %6 in 1 : vector<8x4xf32>, vector<8x124xf32> -> vector<8x128xf32>
    %8 = vector.extract_strided_slice %3 {offsets = [0, 0], sizes = [8, 126], strides = [1, 1]} : vector<8x128xf32> to vector<8x126xf32>
    %9 = tpu.concatenate %4, %8 in 1 : vector<8x2xf32>, vector<8x126xf32> -> vector<8x128xf32>
    %10 = tpu.concatenate %7, %9, %3 in 0 : vector<8x128xf32>, vector<8x128xf32>, vector<8x128xf32> -> vector<24x128xf32>
    %c0_4 = arith.constant 0 : index
    %c0_5 = arith.constant 0 : index
    %11 = vector.load %arg2[%c0_4, %c0_5] : memref<8x24xf32, #tpu.memory_space<vmem>>, vector<8x24xf32>
    %cst_6 = arith.constant dense<0.000000e+00> : vector<8x128xf32>
    %12 = tpu.matmul %11, %10, %cst_6 {dimension_numbers = #tpu.dot_dimension_numbers<[1], [0], [0], [1], [0, 0, 1, 1], [], []>} : vector<8x24xf32>, vector<24x128xf32>, vector<8x128xf32> -> vector<8x128xf32>
    %c0_7 = arith.constant 0 : index
    %c0_8 = arith.constant 0 : index
    %13 = vector.load %arg3[%c0_7, %c0_8] : memref<8x1xf32, #tpu.memory_space<vmem>>, vector<8x1xf32>
    %14 = vector.broadcast %13 : vector<8x1xf32> to vector<8x128xf32>
    %15 = arith.addf %12, %14 : vector<8x128xf32>
    %cst_9 = arith.constant 0.000000e+00 : f32
    %16 = vector.broadcast %cst_9 : f32 to vector<8x128xf32>
    %17 = arith.maximumf %15, %16 : vector<8x128xf32>
    %cst_10 = arith.constant 0.000000e+00 : f32
    %18 = vector.broadcast %cst_10 : f32 to vector<8x2xf32>
    %cst_11 = arith.constant 0.000000e+00 : f32
    %19 = vector.broadcast %cst_11 : f32 to vector<8x4xf32>
    %20 = vector.extract_strided_slice %17 {offsets = [0, 0], sizes = [8, 124], strides = [1, 1]} : vector<8x128xf32> to vector<8x124xf32>
    %21 = tpu.concatenate %19, %20 in 1 : vector<8x4xf32>, vector<8x124xf32> -> vector<8x128xf32>
    %22 = vector.extract_strided_slice %17 {offsets = [0, 0], sizes = [8, 126], strides = [1, 1]} : vector<8x128xf32> to vector<8x126xf32>
    %23 = tpu.concatenate %18, %22 in 1 : vector<8x2xf32>, vector<8x126xf32> -> vector<8x128xf32>
    %24 = tpu.concatenate %21, %23, %17 in 0 : vector<8x128xf32>, vector<8x128xf32>, vector<8x128xf32> -> vector<24x128xf32>
    %c0_12 = arith.constant 0 : index
    %c0_13 = arith.constant 0 : index
    %25 = vector.load %arg4[%c0_12, %c0_13] : memref<8x24xf32, #tpu.memory_space<vmem>>, vector<8x24xf32>
    %cst_14 = arith.constant dense<0.000000e+00> : vector<8x128xf32>
    %26 = tpu.matmul %25, %24, %cst_14 {dimension_numbers = #tpu.dot_dimension_numbers<[1], [0], [0], [1], [0, 0, 1, 1], [], []>} : vector<8x24xf32>, vector<24x128xf32>, vector<8x128xf32> -> vector<8x128xf32>
    %c0_15 = arith.constant 0 : index
    %c0_16 = arith.constant 0 : index
    %27 = vector.load %arg5[%c0_15, %c0_16] : memref<8x1xf32, #tpu.memory_space<vmem>>, vector<8x1xf32>
    %28 = vector.broadcast %27 : vector<8x1xf32> to vector<8x128xf32>
    %29 = arith.addf %26, %28 : vector<8x128xf32>
    %cst_17 = arith.constant 0.000000e+00 : f32
    %30 = vector.broadcast %cst_17 : f32 to vector<8x128xf32>
    %31 = arith.maximumf %29, %30 : vector<8x128xf32>
    %c0_18 = arith.constant 0 : index
    %c0_19 = arith.constant 0 : index
    %32 = vector.load %arg6[%c0_18, %c0_19] : memref<8x8xf32, #tpu.memory_space<vmem>>, vector<8x8xf32>
    %cst_20 = arith.constant dense<0.000000e+00> : vector<8x128xf32>
    %33 = tpu.matmul %32, %3, %cst_20 {dimension_numbers = #tpu.dot_dimension_numbers<[1], [0], [0], [1], [0, 0, 1, 1], [], []>} : vector<8x8xf32>, vector<8x128xf32>, vector<8x128xf32> -> vector<8x128xf32>
    %c0_21 = arith.constant 0 : index
    %c0_22 = arith.constant 0 : index
    %34 = vector.load %arg7[%c0_21, %c0_22] : memref<8x1xf32, #tpu.memory_space<vmem>>, vector<8x1xf32>
    %35 = vector.broadcast %34 : vector<8x1xf32> to vector<8x128xf32>
    %36 = arith.addf %33, %35 : vector<8x128xf32>
    %37 = arith.addf %31, %36 : vector<8x128xf32>
    %cst_23 = arith.constant 0.000000e+00 : f32
    %38 = vector.broadcast %cst_23 : f32 to vector<8x128xf32>
    %39 = arith.maximumf %37, %38 : vector<8x128xf32>
    %c0_24 = arith.constant 0 : index
    %c0_25 = arith.constant 0 : index
    %c0_26 = arith.constant 0 : index
    %40 = vector.load %arg8[%c0_24, %c0_25, %c0_26] : memref<1x8x128xf32, #tpu.memory_space<vmem>>, vector<1x8x128xf32>
    %41 = vector.shape_cast %40 : vector<1x8x128xf32> to vector<8x128xf32>
    %42 = vector.shape_cast %39 : vector<8x128xf32> to vector<1x8x128xf32>
    tpu.vector_store %arg8[%c0_24, %c0_25, %c0_26], %42 {strides = array<i32>} : memref<1x8x128xf32, #tpu.memory_space<vmem>>, vector<1x8x128xf32>,
    return
  }
  func.func @transform_0(%arg0: i32) -> (i32, i32, i32) {
    %c0_i32 = arith.constant 0 : i32
    %c0_i32_0 = arith.constant 0 : i32
    %c0_i32_1 = arith.constant 0 : i32
    return %arg0, %c0_i32, %c0_i32_0 : i32, i32, i32
  }
  func.func @transform_1(%arg0: i32) -> (i32, i32) {
    %c0_i32 = arith.constant 0 : i32
    %c0_i32_0 = arith.constant 0 : i32
    %c0_i32_1 = arith.constant 0 : i32
    return %c0_i32, %c0_i32_0 : i32, i32
  }
  func.func @transform_2(%arg0: i32) -> (i32, i32) {
    %c0_i32 = arith.constant 0 : i32
    %c0_i32_0 = arith.constant 0 : i32
    %c0_i32_1 = arith.constant 0 : i32
    return %c0_i32, %c0_i32_0 : i32, i32
  }
  func.func @transform_3(%arg0: i32) -> (i32, i32) {
    %c0_i32 = arith.constant 0 : i32
    %c0_i32_0 = arith.constant 0 : i32
    %c0_i32_1 = arith.constant 0 : i32
    return %c0_i32, %c0_i32_0 : i32, i32
  }
  func.func @transform_4(%arg0: i32) -> (i32, i32) {
    %c0_i32 = arith.constant 0 : i32
    %c0_i32_0 = arith.constant 0 : i32
    %c0_i32_1 = arith.constant 0 : i32
    return %c0_i32, %c0_i32_0 : i32, i32
  }
  func.func @transform_5(%arg0: i32) -> (i32, i32) {
    %c0_i32 = arith.constant 0 : i32
    %c0_i32_0 = arith.constant 0 : i32
    %c0_i32_1 = arith.constant 0 : i32
    return %c0_i32, %c0_i32_0 : i32, i32
  }
  func.func @transform_6(%arg0: i32) -> (i32, i32) {
    %c0_i32 = arith.constant 0 : i32
    %c0_i32_0 = arith.constant 0 : i32
    %c0_i32_1 = arith.constant 0 : i32
    return %c0_i32, %c0_i32_0 : i32, i32
  }
  func.func @transform_7(%arg0: i32) -> (i32, i32, i32) {
    %c0_i32 = arith.constant 0 : i32
    %c0_i32_0 = arith.constant 0 : i32
    %c0_i32_1 = arith.constant 0 : i32
    return %arg0, %c0_i32, %c0_i32_0 : i32, i32, i32
  }
}

</mosaic_0001>

<llo_original>
// kernel: tpu_custom_call.1
$region0: #{tpu_custom_call.1}
  #allocation0 [shape = 'u32[]', space=smem, size = 0x4, offset = 0x4, fixed_abs, tag = 'smem constant byte address 0x4 - core index']
  #allocation1 [shape = 'u32[144,128]{1,0:T(1,128)}', space=vmem, size = 0x12000, scoped, tag = 'internal scratch']
  %s0 = inlined_call_operand.vmem [shape: f32[2,4,128], index: 0, kind: input, shape index: {}]
  %s1 = inlined_call_operand.vmem [shape: f32[8,24], index: 1, kind: input, shape index: {}]
  %s2 = inlined_call_operand.vmem [shape: f32[8,1], index: 2, kind: input, shape index: {}]
  %s3 = inlined_call_operand.vmem [shape: f32[8,24], index: 3, kind: input, shape index: {}]
  %s4 = inlined_call_operand.vmem [shape: f32[8,1], index: 4, kind: input, shape index: {}]
  %s5 = inlined_call_operand.vmem [shape: f32[8,8], index: 5, kind: input, shape index: {}]
  %s6 = inlined_call_operand.vmem [shape: f32[8,1], index: 6, kind: input, shape index: {}]
  %s7 = inlined_call_operand.hbm [shape: f32[2,8,128], index: 7, kind: output, shape index: {}]
  %s8 = sld [smem:[#allocation0]]
  $region61: #{tpu_custom_call.1} parent=0
    _
  %s10 = ssub.s32 1, %s8
  %s11 = scalar_select 0, %s10, %s8
  $region1: #{tpu_custom_call.1} parent=0
    #allocation2 [shape = 'u8[8192]{0}', space=vmem, size = 0x2000, scoped, tag = 'output window, operand 0']
    #allocation3 [shape = 's32[2]{0}', space=sflag, size = 0x8, scoped, tag = 'scoped memory for tpu_custom_call.1']
    %12 = vsyncpa [#allocation3], 0
    %s13 = scalar_lea.sflag [#allocation3], 1
    %14 = vsyncpa %s13, 0
    loop: start=0, step=1, limit=4
    $region2: #{tpu_custom_call.1} parent=1 // loop_pre_header
      _
    $region3: #{tpu_custom_call.1} parent=1 // loop_header
      %s16 = sphi 0, %s20
      %p17 = scmp.ge.s32.totalorder %s16, 4
      %s26 = sphi 0, %s28
      %s29 = sphi 0, %s26
      %s30 = sphi 0, %s29
      %s46 = sphi 0, %s30
      %s50 = sphi 0, %s50
      %s52 = sphi 0, %s50
      %s53 = sphi 0, %s52
      %s67 = sphi 0, %s53
      %s71 = sphi 0, %s71
      %s73 = sphi 0, %s71
      %s74 = sphi 0, %s73
      %s88 = sphi 0, %s74
      %s92 = sphi 0, %s92
      %s94 = sphi 0, %s92
      %s95 = sphi 0, %s94
      %s109 = sphi 0, %s95
      %s113 = sphi 0, %s113
      %s115 = sphi 0, %s113
      %s116 = sphi 0, %s115
      %s130 = sphi 0, %s116
      %s134 = sphi 0, %s134
      %s136 = sphi 0, %s134
      %s137 = sphi 0, %s136
      %s151 = sphi 0, %s137
      %s155 = sphi 0, %s155
      %s157 = sphi 0, %s155
      %s158 = sphi 0, %s157
      %s172 = sphi 0, %s158
      %s178 = sphi 0, %s180
      %s181 = sphi 0, %s178
      %s182 = sphi 0, %s181
      %s198 = sphi 0, %s182
    $region4: #{tpu_custom_call.1} parent=1 // loop_header_branch
      %19 = sbr.rel (%p17) target = $region8
    $region5: #{tpu_custom_call.1} parent=1 // loop_body
      %s21 = ssub.s32 %s16, 1
      %s22 = ssub.s32 %s16, 2
      %s23 = sadd.s32 %s16, 1
      %s24 = ssub.s32 %s16, %s23
      %p25 = scmp.eq.s32.totalorder %s24, 0
      %s27 = sadd.s32 %s26, 1
      %s28 = scalar_select %p25, %s26, %s27
      %p31 = pneg %p25
      %p32 = scmp.eq.s32.totalorder %s16, 1
      %p33 = por %p31, %p32
      %p34 = scmp.ne.s32.totalorder %s26, %s29
      %p35 = scmp.eq.s32.totalorder %s16, 0
      %p36 = por %p34, %p35
      %p37 = scmp.ne.s32.totalorder %s26, %s29
      %p38 = scmp.eq.s32.totalorder %s21, 1
      %p39 = por %p37, %p38
      %p40 = scmp.ne.s32.totalorder %s29, %s30
      %p41 = scmp.eq.s32.totalorder %s21, 0
      %p42 = por %p40, %p41
      %p43 = scmp.ne.s32.totalorder %s29, %s30
      %p44 = scmp.eq.s32.totalorder %s22, 1
      %p45 = por %p43, %p44
      %p47 = scmp.ne.s32.totalorder %s30, %s46
      %p48 = scmp.eq.s32.totalorder %s22, 0
      %p49 = por %p47, %p48
      %s51 = sadd.s32 %s50, 1
      %p54 = scmp.eq.s32.totalorder %s16, 1
      %p55 = scmp.ne.s32.totalorder %s50, %s52
      %p56 = scmp.eq.s32.totalorder %s16, 0
      %p57 = por %p55, %p56
      %p58 = scmp.ne.s32.totalorder %s50, %s52
      %p59 = scmp.eq.s32.totalorder %s21, 1
      %p60 = por %p58, %p59
      %p61 = scmp.ne.s32.totalorder %s52, %s53
      %p62 = scmp.eq.s32.totalorder %s21, 0
      %p63 = por %p61, %p62
      %p64 = scmp.ne.s32.totalorder %s52, %s53
      %p65 = scmp.eq.s32.totalorder %s22, 1
      %p66 = por %p64, %p65
      %p68 = scmp.ne.s32.totalorder %s53, %s67
      %p69 = scmp.eq.s32.totalorder %s22, 0
      %p70 = por %p68, %p69
      %s72 = sadd.s32 %s71, 1
      %p75 = scmp.eq.s32.totalorder %s16, 1
      %p76 = scmp.ne.s32.totalorder %s71, %s73
      %p77 = scmp.eq.s32.totalorder %s16, 0
      %p78 = por %p76, %p77
      %p79 = scmp.ne.s32.totalorder %s71, %s73
      %p80 = scmp.eq.s32.totalorder %s21, 1
      %p81 = por %p79, %p80
      %p82 = scmp.ne.s32.totalorder %s73, %s74
      %p83 = scmp.eq.s32.totalorder %s21, 0
      %p84 = por %p82, %p83
      %p85 = scmp.ne.s32.totalorder %s73, %s74
      %p86 = scmp.eq.s32.totalorder %s22, 1
      %p87 = por %p85, %p86
      %p89 = scmp.ne.s32.totalorder %s74, %s88
      %p90 = scmp.eq.s32.totalorder %s22, 0
      %p91 = por %p89, %p90
      %s93 = sadd.s32 %s92, 1
      %p96 = scmp.eq.s32.totalorder %s16, 1
      %p97 = scmp.ne.s32.totalorder %s92, %s94
      %p98 = scmp.eq.s32.totalorder %s16, 0
      %p99 = por %p97, %p98
      %p100 = scmp.ne.s32.totalorder %s92, %s94
      %p101 = scmp.eq.s32.totalorder %s21, 1
      %p102 = por %p100, %p101
      %p103 = scmp.ne.s32.totalorder %s94, %s95
      %p104 = scmp.eq.s32.totalorder %s21, 0
      %p105 = por %p103, %p104
      %p106 = scmp.ne.s32.totalorder %s94, %s95
      %p107 = scmp.eq.s32.totalorder %s22, 1
      %p108 = por %p106, %p107
      %p110 = scmp.ne.s32.totalorder %s95, %s109
      %p111 = scmp.eq.s32.totalorder %s22, 0
      %p112 = por %p110, %p111
      %s114 = sadd.s32 %s113, 1
      %p117 = scmp.eq.s32.totalorder %s16, 1
      %p118 = scmp.ne.s32.totalorder %s113, %s115
      %p119 = scmp.eq.s32.totalorder %s16, 0
      %p120 = por %p118, %p119
      %p121 = scmp.ne.s32.totalorder %s113, %s115
      %p122 = scmp.eq.s32.totalorder %s21, 1
      %p123 = por %p121, %p122
      %p124 = scmp.ne.s32.totalorder %s115, %s116
      %p125 = scmp.eq.s32.totalorder %s21, 0
      %p126 = por %p124, %p125
      %p127 = scmp.ne.s32.totalorder %s115, %s116
      %p128 = scmp.eq.s32.totalorder %s22, 1
      %p129 = por %p127, %p128
      %p131 = scmp.ne.s32.totalorder %s116, %s130
      %p132 = scmp.eq.s32.totalorder %s22, 0
      %p133 = por %p131, %p132
      %s135 = sadd.s32 %s134, 1
      %p138 = scmp.eq.s32.totalorder %s16, 1
      %p139 = scmp.ne.s32.totalorder %s134, %s136
      %p140 = scmp.eq.s32.totalorder %s16, 0
      %p141 = por %p139, %p140
      %p142 = scmp.ne.s32.totalorder %s134, %s136
      %p143 = scmp.eq.s32.totalorder %s21, 1
      %p144 = por %p142, %p143
      %p145 = scmp.ne.s32.totalorder %s136, %s137
      %p146 = scmp.eq.s32.totalorder %s21, 0
      %p147 = por %p145, %p146
      %p148 = scmp.ne.s32.totalorder %s136, %s137
      %p149 = scmp.eq.s32.totalorder %s22, 1
      %p150 = por %p148, %p149
      %p152 = scmp.ne.s32.totalorder %s137, %s151
      %p153 = scmp.eq.s32.totalorder %s22, 0
      %p154 = por %p152, %p153
      %s156 = sadd.s32 %s155, 1
      %p159 = scmp.eq.s32.totalorder %s16, 1
      %p160 = scmp.ne.s32.totalorder %s155, %s157
      %p161 = scmp.eq.s32.totalorder %s16, 0
      %p162 = por %p160, %p161
      %p163 = scmp.ne.s32.totalorder %s155, %s157
      %p164 = scmp.eq.s32.totalorder %s21, 1
      %p165 = por %p163, %p164
      %p166 = scmp.ne.s32.totalorder %s157, %s158
      %p167 = scmp.eq.s32.totalorder %s21, 0
      %p168 = por %p166, %p167
      %p169 = scmp.ne.s32.totalorder %s157, %s158
      %p170 = scmp.eq.s32.totalorder %s22, 1
      %p171 = por %p169, %p170
      %p173 = scmp.ne.s32.totalorder %s158, %s172
      %p174 = scmp.eq.s32.totalorder %s22, 0
      %p175 = por %p173, %p174
      %s176 = ssub.s32 %s16, %s23
      %p177 = scmp.eq.s32.totalorder %s176, 0
      %s179 = sadd.s32 %s178, 1
      %s180 = scalar_select %p177, %s178, %s179
      %p183 = pneg %p177
      %p184 = scmp.eq.s32.totalorder %s16, 1
      %p185 = por %p183, %p184
      %p186 = scmp.ne.s32.totalorder %s178, %s181
      %p187 = scmp.eq.s32.totalorder %s16, 0
      %p188 = por %p186, %p187
      %p189 = scmp.ne.s32.totalorder %s178, %s181
      %p190 = scmp.eq.s32.totalorder %s21, 1
      %p191 = por %p189, %p190
      %p192 = scmp.ne.s32.totalorder %s181, %s182
      %p193 = scmp.eq.s32.totalorder %s21, 0
      %p194 = por %p192, %p193
      %p195 = scmp.ne.s32.totalorder %s181, %s182
      %p196 = scmp.eq.s32.totalorder %s22, 1
      %p197 = por %p195, %p196
      %p199 = scmp.ne.s32.totalorder %s182, %s198
      %p200 = scmp.eq.s32.totalorder %s22, 0
      %p201 = por %p199, %p200
      %p202 = scmp.le.s32.totalorder 1, %s16
      %p203 = scmp.lt.s32.totalorder %s16, 3
      %p204 = pnand %p202, %p203
      %p205 = pneg %p204
      // Predicated region
      $region9: #{tpu_custom_call.1} parent=5 // pred_check
        _
      $region10: #{tpu_custom_call.1} parent=5 // pred_check_branch
        %207 = sbr.rel (%p204) target = $region12
      $region11: #{tpu_custom_call.1} parent=5 // pred_region
        %s208 = ssub.s32 %s16, 1
        // Predicated region
        $region13: #{tpu_custom_call.1} parent=11 // pred_check
          %p209 = pneg %p63
        $region14: #{tpu_custom_call.1} parent=11 // pred_check_branch
          %211 = sbr.rel (%p209) target = $region16
        $region15: #{tpu_custom_call.1} parent=11 // pred_region
          _
        $region16: #{tpu_custom_call.1} parent=11 // pred_fallthru
          _
        // Predicated region
        $region17: #{tpu_custom_call.1} parent=11 // pred_check
          %p212 = pneg %p84
        $region18: #{tpu_custom_call.1} parent=11 // pred_check_branch
          %214 = sbr.rel (%p212) target = $region20
        $region19: #{tpu_custom_call.1} parent=11 // pred_region
          _
        $region20: #{tpu_custom_call.1} parent=11 // pred_fallthru
          _
        // Predicated region
        $region21: #{tpu_custom_call.1} parent=11 // pred_check
          %p215 = pneg %p105
        $region22: #{tpu_custom_call.1} parent=11 // pred_check_branch
          %217 = sbr.rel (%p215) target = $region24
        $region23: #{tpu_custom_call.1} parent=11 // pred_region
          _
        $region24: #{tpu_custom_call.1} parent=11 // pred_fallthru
          _
        // Predicated region
        $region25: #{tpu_custom_call.1} parent=11 // pred_check
          %p218 = pneg %p126
        $region26: #{tpu_custom_call.1} parent=11 // pred_check_branch
          %220 = sbr.rel (%p218) target = $region28
        $region27: #{tpu_custom_call.1} parent=11 // pred_region
          _
        $region28: #{tpu_custom_call.1} parent=11 // pred_fallthru
          _
        // Predicated region
        $region29: #{tpu_custom_call.1} parent=11 // pred_check
          %p221 = pneg %p147
        $region30: #{tpu_custom_call.1} parent=11 // pred_check_branch
          %223 = sbr.rel (%p221) target = $region32
        $region31: #{tpu_custom_call.1} parent=11 // pred_region
          _
        $region32: #{tpu_custom_call.1} parent=11 // pred_fallthru
          _
        // Predicated region
        $region33: #{tpu_custom_call.1} parent=11 // pred_check
          %p224 = pneg %p168
        $region34: #{tpu_custom_call.1} parent=11 // pred_check_branch
          %226 = sbr.rel (%p224) target = $region36
        $region35: #{tpu_custom_call.1} parent=11 // pred_region
          _
        $region36: #{tpu_custom_call.1} parent=11 // pred_fallthru
          _
      $region12: #{tpu_custom_call.1} parent=5 // pred_fallthru
        _
      %p227 = scmp.lt.s32.totalorder %s16, 2
      // Predicated region
      $region37: #{tpu_custom_call.1} parent=5 // pred_check
        %p228 = pneg %p227
      $region38: #{tpu_custom_call.1} parent=5 // pred_check_branch
        %230 = sbr.rel (%p228) target = $region40
      $region39: #{tpu_custom_call.1} parent=5 // pred_region
        // Predicated region
        $region41: #{tpu_custom_call.1} parent=39 // pred_check
          %p231 = pneg %p36
        $region42: #{tpu_custom_call.1} parent=39 // pred_check_branch
          %233 = sbr.rel (%p231) target = $region44
        $region43: #{tpu_custom_call.1} parent=39 // pred_region
          %p234 = scmp.lt.s32.totalorder %s16, 1
          %s235 = scalar_select %p234, %s16, 1
          %s236 = smul.addr %s235, 4
          %s237 = scalar_lea.vmem %s0, %s236
        $region44: #{tpu_custom_call.1} parent=39 // pred_fallthru
          _
      $region40: #{tpu_custom_call.1} parent=5 // pred_fallthru
        _
      %p238 = scmp.le.s32.totalorder 1, %s16
      %p239 = scmp.lt.s32.totalorder %s16, 3
      %p240 = pnand %p238, %p239
      %p241 = pneg %p240
      // Predicated region
      $region45: #{tpu_custom_call.1} parent=5 // pred_check
        _
      $region46: #{tpu_custom_call.1} parent=5 // pred_check_branch
        %243 = sbr.rel (%p240) target = $region48
      $region47: #{tpu_custom_call.1} parent=5 // pred_region
        %s244 = ssub.s32 %s16, 1
        %p245 = scmp.lt.s32.totalorder %s21, 1
        %s246 = scalar_select %p245, %s21, 1
        %s247 = smul.addr %s246, 4
        %s248 = scalar_lea.vmem %s0, %s247
        %p249 = pneg %p42
        %p250 = pneg %p39
        %p251 = pneg %p63
        %p252 = pneg %p60
        %p253 = pneg %p84
        %p254 = pneg %p81
        %p255 = pneg %p105
        %p256 = pneg %p102
        %p257 = pneg %p126
        %p258 = pneg %p123
        %p259 = pneg %p147
        %p260 = pneg %p144
        %p261 = pneg %p168
        %p262 = pneg %p165
        %p263 = pneg %p194
        %p264 = pneg %p191
        %s265 = sand.u32 %s181, 1
        %s266 = scalar_lea.sflag [#allocation3], %s265
        %s267 = sand.u32 %s181, 1
        %s268 = smul.addr %s267, 8
        %s269 = scalar_lea.vmem [#allocation2], %s268
        %p270 = scmp.lt.s32.totalorder %s21, 1
        %s271 = scalar_select %p270, %s21, 1
        %s272 = smul.addr %s271, 4
        %s273 = scalar_lea.vmem %s0, %s272
        %v274 = vld [vmem:[%s273] sm:$0xf]
        %vm275 = vcmask 1043456
        %v276 = vsel %vm275, %v274, 0.0
        %278 = vrot.lane.b32.xlu0 %v276, 4
        %v279 = vpop.permute.xlu0 %278
        %vm281 = vcmask 31744
        %v282 = vsel %vm281, 0.0, %v279
        %283 = vrot.lane.b32.xlu0 %v276, 2
        %v284 = vpop.permute.xlu0 %283
        %vm286 = vcmask 15360
        %v287 = vsel %vm286, 0.0, %v284
        %v288 = vld [vmem:[%s1] sm:$0xff]
        %v289 = vld [vmem:[%s2] sm:$0xff]
        %291 = vset.pattern.permute.xlu0 0
        %292 = vperm.xlu0 %291, %v289
        %v293 = vpop.permute.xlu0 %292
        %vm295 = vcmask 195584
        %v297 = vsel %vm295, %v288, 0
        %299 = vmatprep.subr.mxu0 0.0
        %300 = vmatpush1.msra.mxu0 0.0
        %301 = vmatprep.subr.mxu0 0.0
        %302 = vmatpush1.msra.mxu0 0.0
        %303 = vmatprep.subr.mxu0 0.0
        %304 = vmatpush1.msra.mxu0 0.0
        %305 = vmatprep.subr.mxu0 0.0
        %306 = vmatpush1.msra.mxu0 0.0
        %307 = vmatprep.subr.mxu0 0.0
        %308 = vmatpush1.msra.mxu0 0.0
        %309 = vmatprep.subr.mxu0 0.0
        %310 = vmatpush1.msra.mxu0 0.0
        %311 = vmatprep.subr.mxu0 0.0
        %312 = vmatpush1.msra.mxu0 0.0
        %313 = vmatprep.subr.mxu0 0.0
        %314 = vmatpush1.msra.mxu0 0.0
        %315 = vmatprep.subr.mxu0 0.0
        %316 = vmatpush1.msra.mxu0 0.0
        %317 = vmatprep.subr.mxu0 0.0
        %318 = vmatpush1.msra.mxu0 0.0
        %319 = vmatprep.subr.mxu0 0.0
        %320 = vmatpush1.msra.mxu0 0.0
        %321 = vmatprep.subr.mxu0 0.0
        %322 = vmatpush1.msra.mxu0 0.0
        %323 = vmatprep.subr.mxu0 0.0
        %324 = vmatpush1.msra.mxu0 0.0
        %325 = vmatprep.subr.mxu0 0.0
        %326 = vmatpush1.msra.mxu0 %v276
        %327 = vmatprep.subr.mxu0 0.0
        %328 = vmatpush1.msra.mxu0 %v287
        %329 = vmatprep.subr.mxu0 0.0
        %330 = vmatpush1.msra.mxu0 %v282
        %331 = vmatprep.subr.mxu0 0.0
        %332 = vmatpush2.msra.mxu0 0.0
        %333 = vmatprep.subr.mxu0 0.0
        %334 = vmatpush2.msra.mxu0 0.0
        %335 = vmatprep.subr.mxu0 0.0
        %336 = vmatpush2.msra.mxu0 0.0
        %337 = vmatprep.subr.mxu0 0.0
        %338 = vmatpush2.msra.mxu0 0.0
        %339 = vmatprep.subr.mxu0 0.0
        %340 = vmatpush2.msra.mxu0 0.0
        %341 = vmatprep.subr.mxu0 0.0
        %342 = vmatpush2.msra.mxu0 0.0
        %343 = vmatprep.subr.mxu0 0.0
        %344 = vmatpush2.msra.mxu0 0.0
        %345 = vmatprep.subr.mxu0 0.0
        %346 = vmatpush2.msra.mxu0 0.0
        %347 = vmatprep.subr.mxu0 0.0
        %348 = vmatpush2.msra.mxu0 0.0
        %349 = vmatprep.subr.mxu0 0.0
        %350 = vmatpush2.msra.mxu0 0.0
        %351 = vmatprep.subr.mxu0 0.0
        %352 = vmatpush2.msra.mxu0 0.0
        %353 = vmatprep.subr.mxu0 0.0
        %354 = vmatpush2.msra.mxu0 0.0
        %355 = vmatprep.subr.mxu0 0.0
        %356 = vmatpush2.msra.mxu0 0.0
        %357 = vmatprep.subr.mxu0 0.0
        %358 = vmatpush2.msra.mxu0 0.0
        %359 = vmatprep.subr.mxu0 0.0
        %360 = vmatpush2.msra.mxu0 0.0
        %361 = vmatprep.subr.mxu0 0.0
        %362 = vmatpush2.msra.mxu0 0.0
        %363 = vmatprep.mubr.f32.mxu0 0.0
        %364 = vmatmul.mubr.f32.gmra.mxu0 %v297
        %v365 = vpop.f32.mrf.mxu0
        %v366 = vadd.f32 %v293, %v365
        %v367 = vpop.f32.mrf.mxu0
        %368 = vdwg.mxu0
        %v369 = vmax.f32 %v366, 0.0
        %371 = vrot.lane.b32.xlu0 %v369, 4
        %v372 = vpop.permute.xlu0 %371
        %v374 = vsel %vm281, 0.0, %v372
        %375 = vrot.lane.b32.xlu0 %v369, 2
        %v376 = vpop.permute.xlu0 %375
        %v378 = vsel %vm286, 0.0, %v376
        %v379 = vld [vmem:[%s3] sm:$0xff]
        %v380 = vld [vmem:[%s4] sm:$0xff]
        %382 = vset.pattern.permute.xlu0 0
        %383 = vperm.xlu0 %382, %v380
        %v384 = vpop.permute.xlu0 %383
        %v387 = vsel %vm295, %v379, 0
        %389 = vmatprep.subr.mxu0 0.0
        %390 = vmatpush1.msra.mxu0 0.0
        %391 = vmatprep.subr.mxu0 0.0
        %392 = vmatpush1.msra.mxu0 0.0
        %393 = vmatprep.subr.mxu0 0.0
        %394 = vmatpush1.msra.mxu0 0.0
        %395 = vmatprep.subr.mxu0 0.0
        %396 = vmatpush1.msra.mxu0 0.0
        %397 = vmatprep.subr.mxu0 0.0
        %398 = vmatpush1.msra.mxu0 0.0
        %399 = vmatprep.subr.mxu0 0.0
        %400 = vmatpush1.msra.mxu0 0.0
        %401 = vmatprep.subr.mxu0 0.0
        %402 = vmatpush1.msra.mxu0 0.0
        %403 = vmatprep.subr.mxu0 0.0
        %404 = vmatpush1.msra.mxu0 0.0
        %405 = vmatprep.subr.mxu0 0.0
        %406 = vmatpush1.msra.mxu0 0.0
        %407 = vmatprep.subr.mxu0 0.0
        %408 = vmatpush1.msra.mxu0 0.0
        %409 = vmatprep.subr.mxu0 0.0
        %410 = vmatpush1.msra.mxu0 0.0
        %411 = vmatprep.subr.mxu0 0.0
        %412 = vmatpush1.msra.mxu0 0.0
        %413 = vmatprep.subr.mxu0 0.0
        %414 = vmatpush1.msra.mxu0 0.0
        %415 = vmatprep.subr.mxu0 0.0
        %416 = vmatpush1.msra.mxu0 %v369
        %417 = vmatprep.subr.mxu0 0.0
        %418 = vmatpush1.msra.mxu0 %v378
        %419 = vmatprep.subr.mxu0 0.0
        %420 = vmatpush1.msra.mxu0 %v374
        %421 = vmatprep.subr.mxu0 0.0
        %422 = vmatpush2.msra.mxu0 0.0
        %423 = vmatprep.subr.mxu0 0.0
        %424 = vmatpush2.msra.mxu0 0.0
        %425 = vmatprep.subr.mxu0 0.0
        %426 = vmatpush2.msra.mxu0 0.0
        %427 = vmatprep.subr.mxu0 0.0
        %428 = vmatpush2.msra.mxu0 0.0
        %429 = vmatprep.subr.mxu0 0.0
        %430 = vmatpush2.msra.mxu0 0.0
        %431 = vmatprep.subr.mxu0 0.0
        %432 = vmatpush2.msra.mxu0 0.0
        %433 = vmatprep.subr.mxu0 0.0
        %434 = vmatpush2.msra.mxu0 0.0
        %435 = vmatprep.subr.mxu0 0.0
        %436 = vmatpush2.msra.mxu0 0.0
        %437 = vmatprep.subr.mxu0 0.0
        %438 = vmatpush2.msra.mxu0 0.0
        %439 = vmatprep.subr.mxu0 0.0
        %440 = vmatpush2.msra.mxu0 0.0
        %441 = vmatprep.subr.mxu0 0.0
        %442 = vmatpush2.msra.mxu0 0.0
        %443 = vmatprep.subr.mxu0 0.0
        %444 = vmatpush2.msra.mxu0 0.0
        %445 = vmatprep.subr.mxu0 0.0
        %446 = vmatpush2.msra.mxu0 0.0
        %447 = vmatprep.subr.mxu0 0.0
        %448 = vmatpush2.msra.mxu0 0.0
        %449 = vmatprep.subr.mxu0 0.0
        %450 = vmatpush2.msra.mxu0 0.0
        %451 = vmatprep.subr.mxu0 0.0
        %452 = vmatpush2.msra.mxu0 0.0
        %453 = vmatprep.mubr.f32.mxu0 0.0
        %454 = vmatmul.mubr.f32.gmra.mxu0 %v387
        %v455 = vpop.f32.mrf.mxu0
        %v456 = vadd.f32 %v384, %v455
        %v457 = vpop.f32.mrf.mxu0
        %458 = vdwg.mxu0
        %v459 = vmax.f32 %v456, 0.0
        %v460 = vld [vmem:[%s5] sm:$0xff]
        %v461 = vld [vmem:[%s6] sm:$0xff]
        %463 = vset.pattern.permute.xlu0 0
        %464 = vperm.xlu0 %463, %v461
        %v465 = vpop.permute.xlu0 %464
        %vm467 = vcmask 64512
        %v469 = vsel %vm467, %v460, 0
        %471 = vmatprep.subr.mxu0 0.0
        %472 = vmatpush1.msra.mxu0 0.0
        %473 = vmatprep.subr.mxu0 0.0
        %474 = vmatpush1.msra.mxu0 0.0
        %475 = vmatprep.subr.mxu0 0.0
        %476 = vmatpush1.msra.mxu0 0.0
        %477 = vmatprep.subr.mxu0 0.0
        %478 = vmatpush1.msra.mxu0 0.0
        %479 = vmatprep.subr.mxu0 0.0
        %480 = vmatpush1.msra.mxu0 0.0
        %481 = vmatprep.subr.mxu0 0.0
        %482 = vmatpush1.msra.mxu0 0.0
        %483 = vmatprep.subr.mxu0 0.0
        %484 = vmatpush1.msra.mxu0 0.0
        %485 = vmatprep.subr.mxu0 0.0
        %486 = vmatpush1.msra.mxu0 0.0
        %487 = vmatprep.subr.mxu0 0.0
        %488 = vmatpush1.msra.mxu0 0.0
        %489 = vmatprep.subr.mxu0 0.0
        %490 = vmatpush1.msra.mxu0 0.0
        %491 = vmatprep.subr.mxu0 0.0
        %492 = vmatpush1.msra.mxu0 0.0
        %493 = vmatprep.subr.mxu0 0.0
        %494 = vmatpush1.msra.mxu0 0.0
        %495 = vmatprep.subr.mxu0 0.0
        %496 = vmatpush1.msra.mxu0 0.0
        %497 = vmatprep.subr.mxu0 0.0
        %498 = vmatpush1.msra.mxu0 0.0
        %499 = vmatprep.subr.mxu0 0.0
        %500 = vmatpush1.msra.mxu0 0.0
        %501 = vmatprep.subr.mxu0 0.0
        %502 = vmatpush1.msra.mxu0 %v276
        %503 = vmatprep.subr.mxu0 0.0
        %504 = vmatpush2.msra.mxu0 0.0
        %505 = vmatprep.subr.mxu0 0.0
        %506 = vmatpush2.msra.mxu0 0.0
        %507 = vmatprep.subr.mxu0 0.0
        %508 = vmatpush2.msra.mxu0 0.0
        %509 = vmatprep.subr.mxu0 0.0
        %510 = vmatpush2.msra.mxu0 0.0
        %511 = vmatprep.subr.mxu0 0.0
        %512 = vmatpush2.msra.mxu0 0.0
        %513 = vmatprep.subr.mxu0 0.0
        %514 = vmatpush2.msra.mxu0 0.0
        %515 = vmatprep.subr.mxu0 0.0
        %516 = vmatpush2.msra.mxu0 0.0
        %517 = vmatprep.subr.mxu0 0.0
        %518 = vmatpush2.msra.mxu0 0.0
        %519 = vmatprep.subr.mxu0 0.0
        %520 = vmatpush2.msra.mxu0 0.0
        %521 = vmatprep.subr.mxu0 0.0
        %522 = vmatpush2.msra.mxu0 0.0
        %523 = vmatprep.subr.mxu0 0.0
        %524 = vmatpush2.msra.mxu0 0.0
        %525 = vmatprep.subr.mxu0 0.0
        %526 = vmatpush2.msra.mxu0 0.0
        %527 = vmatprep.subr.mxu0 0.0
        %528 = vmatpush2.msra.mxu0 0.0
        %529 = vmatprep.subr.mxu0 0.0
        %530 = vmatpush2.msra.mxu0 0.0
        %531 = vmatprep.subr.mxu0 0.0
        %532 = vmatpush2.msra.mxu0 0.0
        %533 = vmatprep.subr.mxu0 0.0
        %534 = vmatpush2.msra.mxu0 0.0
        %535 = vmatprep.mubr.f32.mxu0 0.0
        %536 = vmatmul.mubr.f32.gmra.mxu0 %v469
        %v537 = vpop.f32.mrf.mxu0
        %v538 = vadd.f32 %v465, %v537
        %v539 = vpop.f32.mrf.mxu0
        %540 = vdwg.mxu0
        %v541 = vadd.f32 %v459, %v538
        %v542 = vmax.f32 %v541, 0.0
        %543 = vst [vmem:[%s269] sm:$0xff] %v542
        %s544 = sand.u32 %s181, 1
        %s545 = scalar_lea.sflag [#allocation3], %s544
        %s546 = sand.u32 %s181, 1
        %s547 = smul.addr %s546, 8
        %s548 = scalar_lea.vmem [#allocation2], %s547
        // Predicated region
        $region49: #{tpu_custom_call.1} parent=47 // pred_check
          %p549 = pneg %p191
        $region50: #{tpu_custom_call.1} parent=47 // pred_check_branch
          %551 = sbr.rel (%p549) target = $region52
        $region51: #{tpu_custom_call.1} parent=47 // pred_region
          %s553 = ssub.s32 128, 128
          %554 = vsyncadd %s545, %s553
          %s555 = smul.addr %s21, 128
          %s556 = scalar_lea.hbm %s7, %s555
          %s558 = sshll.u32 %s548, 4
          %s559 = int_to_ptr.vmem [resolvable:$true] %s558
          %561 = dma.vmem_to_hbm [thread:$0]  %s559, 128, %s556, %s545
        $region52: #{tpu_custom_call.1} parent=47 // pred_fallthru
          _
      $region48: #{tpu_custom_call.1} parent=5 // pred_fallthru
        _
      %p562 = scmp.le.s32.totalorder 2, %s16
      // Predicated region
      $region53: #{tpu_custom_call.1} parent=5 // pred_check
        %p563 = pneg %p562
      $region54: #{tpu_custom_call.1} parent=5 // pred_check_branch
        %565 = sbr.rel (%p563) target = $region56
      $region55: #{tpu_custom_call.1} parent=5 // pred_region
        %s566 = ssub.s32 %s16, 2
        // Predicated region
        $region57: #{tpu_custom_call.1} parent=55 // pred_check
          %p567 = pneg %p197
        $region58: #{tpu_custom_call.1} parent=55 // pred_check_branch
          %569 = sbr.rel (%p567) target = $region60
        $region59: #{tpu_custom_call.1} parent=55 // pred_region
          %s570 = sand.u32 %s182, 1
          %s571 = scalar_lea.sflag [#allocation3], %s570
          %s572 = sand.u32 %s182, 1
          %s573 = smul.addr %s572, 8
          %s574 = scalar_lea.vmem [#allocation2], %s573
          %575 = dma.done %s571, 128
        $region60: #{tpu_custom_call.1} parent=55 // pred_fallthru
          _
      $region56: #{tpu_custom_call.1} parent=5 // pred_fallthru
        _
    $region6: #{tpu_custom_call.1} parent=1 // loop_footer
      %s20 = sadd.s32 1, %s16
    $region7: #{tpu_custom_call.1} parent=1 // loop_footer_branch
      %15 = sbr.rel target = $region3
    $region8: #{tpu_custom_call.1} parent=1 // loop_exit
      _
    %576 = vsyncpa [#allocation3], 1
    %s577 = scalar_lea.sflag [#allocation3], 1
    %578 = vsyncpa %s577, 1

</llo_original>
